<compile_context>
chip_gen: v5e
topology: v5e:2x2
jax: 0.10.0
libtpu: 0.0.40
codegen_flags: <defaults>
</compile_context>

<pallas_src>
import jax
import jax.numpy as jnp
import numpy as np
from jax.experimental import pallas as pl
from jax.experimental.pallas import tpu as pltpu


def _vmem():
    # Whole-array block resident in VMEM (all operands here are tiny).
    return pl.BlockSpec(memory_space=pltpu.MemorySpace.VMEM)


# ----------------------------------------------------------------------------
# Fused kernel: 2 x MPNN layer + Granola normalization head
# ----------------------------------------------------------------------------
def granola_fused_kernel(src_col_ref, dst_col_ref, dst_row_ref,   # int32 edge indices
                         h_ref, e_ref, rnf_ref,                   # bf16 activations
                         wsd_ref, uw1_ref, wsq_ref, bias_ref,     # packed MPNN params
                         gbw1_ref, gbb1_ref, gbw2_ref, gbb2_ref,  # packed norm head
                         out_ref):
    f32 = jnp.float32
    bf16 = jnp.bfloat16
    N, C = out_ref.shape
    E = e_ref.shape[0]

    def dotf(a, b):  # bf16 x bf16 -> f32 accumulate (native MXU path)
        return jnp.dot(a, b, preferred_element_type=f32)

    # One-hot gather/scatter matrices built in-kernel (bf16: 0/1 exact); they never
    # touch HBM. Both orientations are built with iota compares (cheap VPU work) so
    # every dot is a plain untransposed matmul.
    iota_en = jax.lax.broadcasted_iota(jnp.int32, (E, N), 1)
    g_src = (src_col_ref[...] == iota_en).astype(f32).astype(bf16)    # [E, N]
    g_dst = (dst_col_ref[...] == iota_en).astype(f32).astype(bf16)    # [E, N]
    iota_ne = jax.lax.broadcasted_iota(jnp.int32, (N, E), 0)
    s_dst = (iota_ne == dst_row_ref[...]).astype(f32).astype(bf16)    # [N, E]

    e_bf = e_ref[...]                     # bf16 [E, C], fed straight to the MXU
    h = h_ref[...].astype(f32)            # resident node state, f32 elementwise

    for l in range(2):                    # static unroll: 2 MPNN layers
        rnf_bf = rnf_ref[l]               # bf16 [N, C]
        mb1 = bias_ref[l, 0]              # f32 [1, C]
        mb2 = bias_ref[l, 1]
        ub1 = bias_ref[l, 2]
        ub2 = bias_ref[l, 3]

        # message_fn first layer, decomposed over cat([h_src, rnf_src, e, h_dst, rnf_dst]):
        # per-node src/dst contributions in ONE wide dot, then gathered to edges via
        # one-hot matmuls (exact selection).
        hr = jnp.concatenate([h.astype(bf16), rnf_bf], axis=1)        # [N, 2C] bf16
        a_both = dotf(hr, wsd_ref[l])                                 # [N, 2C] f32
        a_src = a_both[:, :C].astype(bf16)
        a_dst = a_both[:, C:].astype(bf16)
        mhid = (dotf(g_src, a_src) + dotf(g_dst, a_dst)
                + dotf(e_bf, wsq_ref[l, 0]) + mb1)                    # [E, C] f32
        msg = dotf(jnp.maximum(mhid, 0.0).astype(bf16), wsq_ref[l, 1]) + mb2   # [E, C]

        # scatter-sum of messages into destination nodes
        m_sum = dotf(s_dst, msg.astype(bf16))                         # [N, C] f32

        # update_fn: ONE wide dot over cat([m_sum, h])
        mh = jnp.concatenate([m_sum.astype(bf16), h.astype(bf16)], axis=1)      # [N, 2C]
        uhid = jnp.maximum(dotf(mh, uw1_ref[l]) + ub1, 0.0)           # [N, C] f32
        h = dotf(uhid.astype(bf16), wsq_ref[l, 2]) + ub2              # new resident h (f32)

    # ---------------- Granola norm head ----------------
    h_bf = h.astype(bf16)
    hid = jnp.maximum(dotf(h_bf, gbw1_ref[...]) + gbb1_ref[...], 0.0)  # [N, 2C] f32
    gb = dotf(hid.astype(bf16), gbw2_ref[...]) + gbb2_ref[...]         # [N, 2C] = [gamma|beta]
    gamma = gb[:, :C]
    beta = gb[:, C:]

    mu = jnp.mean(h, axis=-1, keepdims=True)
    # torch.std default is unbiased (ddof=1); like torch, no eps is added.
    var = jnp.sum((h - mu) * (h - mu), axis=-1, keepdims=True) * (1.0 / (C - 1))
    inv_sigma = jax.lax.rsqrt(var)        # EUP rsqrt instead of sqrt + vector divide
    out_ref[...] = (gamma * ((h - mu) * inv_sigma) + beta).astype(out_ref.dtype)


# ----------------------------------------------------------------------------
# Parameter packing (done ONCE, outside the hot path): weights pre-split / stacked
# so the kernel never concatenates weights and gets few, wide bf16 operands.
# ----------------------------------------------------------------------------
def pack_granola_params(params, dtype=jnp.bfloat16):
    f32 = jnp.float32
    C = params["gamma"][0].shape[0]
    wsd, uw1s, wsq, bias = [], [], [], []
    for (mw1, mb1, mw2, mb2), (uw1, ub1, uw2, ub2) in params["mpnn"]:
        # mw1 rows: [h_src | rnf_src | e | h_dst | rnf_dst], each C rows.
        w_src = jnp.concatenate([mw1[0:C], mw1[C:2 * C]], axis=0)          # [2C, C]
        w_dst = jnp.concatenate([mw1[3 * C:4 * C], mw1[4 * C:5 * C]], axis=0)
        wsd.append(jnp.concatenate([w_src, w_dst], axis=1))                # [2C, 2C]
        uw1s.append(uw1)                                                   # [2C, C]
        wsq.append(jnp.stack([mw1[2 * C:3 * C], mw2, uw2]))                # [3, C, C]
        bias.append(jnp.stack([mb1, mb2, ub1, ub2]))                       # [4, 1, C]
    gw1, gb1, gw2, gb2 = params["gamma"]
    bw1, bb1, bw2, bb2 = params["beta"]
    zeros = jnp.zeros((C, C), f32)
    gbw2 = jnp.concatenate(
        [jnp.concatenate([gw2, zeros], axis=1),
         jnp.concatenate([zeros, bw2], axis=1)], axis=0)                   # [2C, 2C] block-diag
    return dict(
        wsd=jnp.stack(wsd).astype(dtype),                # [2, 2C, 2C]
        uw1=jnp.stack(uw1s).astype(dtype),               # [2, 2C, C]
        wsq=jnp.stack(wsq).astype(dtype),                # [2, 3, C, C] (w_e, mw2, uw2)
        bias=jnp.stack(bias).astype(f32),                # [2, 4, 1, C]  biases stay f32
        gbw1=jnp.concatenate([gw1, bw1], axis=1).astype(dtype),   # [C, 2C]
        gbb1=jnp.concatenate([gb1, bb1], axis=1).astype(f32),     # [1, 2C]
        gbw2=gbw2.astype(dtype),                                  # [2C, 2C]
        gbb2=jnp.concatenate([gb2, bb2], axis=1).astype(f32),     # [1, 2C]
    )


# ----------------------------------------------------------------------------
# Forward wrapper: everything hot runs in the single fused kernel. Operand prep
# (bf16 casts, index reshapes, weight packing) is hoisted to the caller.
# ----------------------------------------------------------------------------
def granola_forward(src_col, dst_col, dst_row, h_bf, e_bf, rnf_bf, packed):
    N, C = h_bf.shape
    args = (src_col, dst_col, dst_row, h_bf, e_bf, rnf_bf,
            packed["wsd"], packed["uw1"], packed["wsq"], packed["bias"],
            packed["gbw1"], packed["gbb1"], packed["gbw2"], packed["gbb2"])
    out = pl.pallas_call(
        granola_fused_kernel,
        out_shape=jax.ShapeDtypeStruct((N, C), jnp.float32),
        in_specs=[_vmem()] * len(args),
        out_specs=_vmem(),
        # Explicit VMEM budget; v7x has only 64 MiB physical (32 MiB scoped default).
        compiler_params=pltpu.CompilerParams(vmem_limit_bytes=32 * 1024 * 1024),
    )(*args)
    return out, e_bf


# ----------------------------------------------------------------------------
# Parameter init (deterministic, torch-like uniform(-1/sqrt(fan_in), +1/sqrt(fan_in)))
# ----------------------------------------------------------------------------
def init_linear(key, din, dout):
    kw, kb = jax.random.split(key)
    bound = 1.0 / np.sqrt(din)
    w = jax.random.uniform(kw, (din, dout), jnp.float32, -bound, bound)
    b = jax.random.uniform(kb, (1, dout), jnp.float32, -bound, bound)
    return w, b


def init_mlp2(key, din, dhid, dout):
    k1, k2 = jax.random.split(key)
    w1, b1 = init_linear(k1, din, dhid)
    w2, b2 = init_linear(k2, dhid, dout)
    return (w1, b1, w2, b2)


# ----------------------------------------------------------------------------
# Pure-JAX reference: same math as the PyTorch module, mirroring the kernel's
# bf16-at-dot-boundaries / f32-elementwise quantization so the comparison is tight.
# ----------------------------------------------------------------------------
def granola_forward_ref(h, e, src, dst, params, rnf):
    f32 = jnp.float32
    q = lambda x: x.astype(jnp.bfloat16).astype(f32)   # emulate bf16 MXU operands

    N, C = h.shape
    h = q(h)
    e = q(e)
    for l in range(2):
        (mw1, mb1, mw2, mb2), (uw1, ub1, uw2, ub2) = params["mpnn"][l]
        hr = jnp.concatenate([q(h), q(rnf[l])], axis=1)                       # [N, 2C]
        a_src = hr @ q(jnp.concatenate([mw1[0:C], mw1[C:2 * C]], axis=0))     # [N, C]
        a_dst = hr @ q(jnp.concatenate([mw1[3 * C:4 * C], mw1[4 * C:5 * C]], axis=0))
        mhid = q(a_src)[src] + q(a_dst)[dst] + e @ q(mw1[2 * C:3 * C]) + mb1  # [E, C]
        msg = q(jnp.maximum(mhid, 0.0)) @ q(mw2) + mb2
        m_sum = jnp.zeros((N, C), f32).at[dst].add(q(msg))
        mh = jnp.concatenate([q(m_sum), q(h)], axis=1)
        uhid = jnp.maximum(mh @ q(uw1) + ub1, 0.0)
        h = q(uhid) @ q(uw2) + ub2

    gw1, gb1, gw2, gb2 = params["gamma"]
    bw1, bb1, bw2, bb2 = params["beta"]
    hb = q(h)
    hid_g = jnp.maximum(hb @ q(gw1) + gb1, 0.0)
    hid_b = jnp.maximum(hb @ q(bw1) + bb1, 0.0)
    gamma = q(hid_g) @ q(gw2) + gb2
    beta = q(hid_b) @ q(bw2) + bb2

    mu = jnp.mean(h, axis=-1, keepdims=True)
    sigma = jnp.sqrt(jnp.sum((h - mu) ** 2, axis=-1, keepdims=True) / (C - 1))
    return gamma * ((h - mu) / sigma) + beta, e


if __name__ == "__main__":
    C = 32   # in_channels
    N = 8    # nodes
    key = jax.random.PRNGKey(0)
    keys = jax.random.split(key, 12)

    # simple bidirectional ring graph: E = 2 * N edges
    src_np = np.concatenate([np.arange(N), (np.arange(N) + 1) % N]).astype(np.int32)
    dst_np = np.concatenate([(np.arange(N) + 1) % N, np.arange(N)]).astype(np.int32)
    src = jnp.asarray(src_np)
    dst = jnp.asarray(dst_np)
    E = int(src.shape[0])

    h = jax.random.normal(keys[0], (N, C), jnp.float32)
    e = jax.random.normal(keys[1], (E, C), jnp.float32)

    params = {
        "mpnn": [
            (init_mlp2(keys[2], 5 * C, C, C), init_mlp2(keys[3], 2 * C, C, C)),
            (init_mlp2(keys[4], 5 * C, C, C), init_mlp2(keys[5], 2 * C, C, C)),
        ],
        "gamma": init_mlp2(keys[6], C, C, C),
        "beta": init_mlp2(keys[7], C, C, C),
    }
    # rnf=True branch: fresh gaussian noise per layer (shared with the reference)
    rnf = jnp.stack([jax.random.normal(keys[8], (N, C), jnp.float32),
                     jax.random.normal(keys[9], (N, C), jnp.float32)])

    # ---- one-time prep hoisted out of the hot path (steady-state inputs) ----
    packed = pack_granola_params(params)
    bf16 = jnp.bfloat16
    h_bf = h.astype(bf16)
    e_bf = e.astype(bf16)
    rnf_bf = rnf.astype(bf16)
    src_col = src.reshape(E, 1)
    dst_col = dst.reshape(E, 1)
    dst_row = dst.reshape(1, E)

    fwd = jax.jit(granola_forward)
    out, e_out = fwd(src_col, dst_col, dst_row, h_bf, e_bf, rnf_bf, packed)
    out = jax.block_until_ready(out)

    ref, _ = granola_forward_ref(h, e, src, dst, params, rnf)
    np.testing.assert_allclose(np.asarray(out), np.asarray(ref), rtol=1e-3, atol=1e-3)

    print("KERNEL_OK")
</pallas_src>

<mosaic_0001>
module attributes {stable_mosaic.version = 11 : i64} {
  func.func @granola_fused_kernel(%arg0: memref<16x1xi32, #tpu.memory_space<vmem>>, %arg1: memref<16x1xi32, #tpu.memory_space<vmem>>, %arg2: memref<1x16xi32, #tpu.memory_space<vmem>>, %arg3: memref<8x32xbf16, #tpu.memory_space<vmem>>, %arg4: memref<16x32xbf16, #tpu.memory_space<vmem>>, %arg5: memref<2x8x32xbf16, #tpu.memory_space<vmem>>, %arg6: memref<2x64x64xbf16, #tpu.memory_space<vmem>>, %arg7: memref<2x64x32xbf16, #tpu.memory_space<vmem>>, %arg8: memref<2x3x32x32xbf16, #tpu.memory_space<vmem>>, %arg9: memref<2x4x1x32xf32, #tpu.memory_space<vmem>>, %arg10: memref<32x64xbf16, #tpu.memory_space<vmem>>, %arg11: memref<1x64xf32, #tpu.memory_space<vmem>>, %arg12: memref<64x64xbf16, #tpu.memory_space<vmem>>, %arg13: memref<1x64xf32, #tpu.memory_space<vmem>>, %arg14: memref<8x32xf32, #tpu.memory_space<vmem>>) attributes {dimension_semantics = [], scalar_prefetch = 0 : i64, scratch_operands = 0 : i64, tpu.core_type = #tpu.core_type<tc>} {
    %0 = tpu.iota {dimensions = array<i32: 1>} : vector<16x8xi32>
    %c0 = arith.constant 0 : index
    %c0_0 = arith.constant 0 : index
    %1 = vector.load %arg0[%c0, %c0_0] : memref<16x1xi32, #tpu.memory_space<vmem>>, vector<16x1xi32>
    %2 = vector.broadcast %1 : vector<16x1xi32> to vector<16x8xi32>
    %3 = arith.cmpi eq, %2, %0 : vector<16x8xi32>
    %4 = arith.extui %3 : vector<16x8xi1> to vector<16x8xi32>
    %5 = arith.sitofp %4 : vector<16x8xi32> to vector<16x8xf32>
    %6 = arith.truncf %5 : vector<16x8xf32> to vector<16x8xbf16>
    %c0_1 = arith.constant 0 : index
    %c0_2 = arith.constant 0 : index
    %7 = vector.load %arg1[%c0_1, %c0_2] : memref<16x1xi32, #tpu.memory_space<vmem>>, vector<16x1xi32>
    %8 = vector.broadcast %7 : vector<16x1xi32> to vector<16x8xi32>
    %9 = arith.cmpi eq, %8, %0 : vector<16x8xi32>
    %10 = arith.extui %9 : vector<16x8xi1> to vector<16x8xi32>
    %11 = arith.sitofp %10 : vector<16x8xi32> to vector<16x8xf32>
    %12 = arith.truncf %11 : vector<16x8xf32> to vector<16x8xbf16>
    %13 = tpu.iota {dimensions = array<i32: 0>} : vector<8x16xi32>
    %c0_3 = arith.constant 0 : index
    %c0_4 = arith.constant 0 : index
    %14 = vector.load %arg2[%c0_3, %c0_4] : memref<1x16xi32, #tpu.memory_space<vmem>>, vector<1x16xi32>
    %15 = vector.broadcast %14 : vector<1x16xi32> to vector<8x16xi32>
    %16 = arith.cmpi eq, %13, %15 : vector<8x16xi32>
    %17 = arith.extui %16 : vector<8x16xi1> to vector<8x16xi32>
    %18 = arith.sitofp %17 : vector<8x16xi32> to vector<8x16xf32>
    %19 = arith.truncf %18 : vector<8x16xf32> to vector<8x16xbf16>
    %c0_5 = arith.constant 0 : index
    %c0_6 = arith.constant 0 : index
    %20 = vector.load %arg4[%c0_5, %c0_6] : memref<16x32xbf16, #tpu.memory_space<vmem>>, vector<16x32xbf16>
    %c0_7 = arith.constant 0 : index
    %c0_8 = arith.constant 0 : index
    %21 = vector.load %arg3[%c0_7, %c0_8] : memref<8x32xbf16, #tpu.memory_space<vmem>>, vector<8x32xbf16>
    %22 = arith.extf %21 : vector<8x32xbf16> to vector<8x32xf32>
    %c0_9 = arith.constant 0 : index
    %c0_10 = arith.constant 0 : index
    %c0_11 = arith.constant 0 : index
    %23 = vector.load %arg5[%c0_9, %c0_10, %c0_11] : memref<2x8x32xbf16, #tpu.memory_space<vmem>>, vector<1x8x32xbf16>
    %24 = vector.shape_cast %23 : vector<1x8x32xbf16> to vector<8x32xbf16>
    %c0_12 = arith.constant 0 : index
    %c0_13 = arith.constant 0 : index
    %c0_14 = arith.constant 0 : index
    %c0_15 = arith.constant 0 : index
    %25 = vector.load %arg9[%c0_12, %c0_13, %c0_14, %c0_15] : memref<2x4x1x32xf32, #tpu.memory_space<vmem>>, vector<1x1x1x32xf32>
    %26 = vector.shape_cast %25 : vector<1x1x1x32xf32> to vector<1x32xf32>
    %c0_16 = arith.constant 0 : index
    %c1 = arith.constant 1 : index
    %c0_17 = arith.constant 0 : index
    %c0_18 = arith.constant 0 : index
    %27 = vector.load %arg9[%c0_16, %c1, %c0_17, %c0_18] : memref<2x4x1x32xf32, #tpu.memory_space<vmem>>, vector<1x1x1x32xf32>
    %28 = vector.shape_cast %27 : vector<1x1x1x32xf32> to vector<1x32xf32>
    %c0_19 = arith.constant 0 : index
    %c2 = arith.constant 2 : index
    %c0_20 = arith.constant 0 : index
    %c0_21 = arith.constant 0 : index
    %29 = vector.load %arg9[%c0_19, %c2, %c0_20, %c0_21] : memref<2x4x1x32xf32, #tpu.memory_space<vmem>>, vector<1x1x1x32xf32>
    %30 = vector.shape_cast %29 : vector<1x1x1x32xf32> to vector<1x32xf32>
    %c0_22 = arith.constant 0 : index
    %c3 = arith.constant 3 : index
    %c0_23 = arith.constant 0 : index
    %c0_24 = arith.constant 0 : index
    %31 = vector.load %arg9[%c0_22, %c3, %c0_23, %c0_24] : memref<2x4x1x32xf32, #tpu.memory_space<vmem>>, vector<1x1x1x32xf32>
    %32 = vector.shape_cast %31 : vector<1x1x1x32xf32> to vector<1x32xf32>
    %33 = arith.truncf %22 : vector<8x32xf32> to vector<8x32xbf16>
    %34 = tpu.concatenate %33, %24 in 1 : vector<8x32xbf16>, vector<8x32xbf16> -> vector<8x64xbf16>
    %c0_25 = arith.constant 0 : index
    %c0_26 = arith.constant 0 : index
    %c0_27 = arith.constant 0 : index
    %35 = vector.load %arg6[%c0_25, %c0_26, %c0_27] : memref<2x64x64xbf16, #tpu.memory_space<vmem>>, vector<1x64x64xbf16>
    %36 = vector.shape_cast %35 : vector<1x64x64xbf16> to vector<64x64xbf16>
    %cst = arith.constant dense<0.000000e+00> : vector<8x64xf32>
    %37 = tpu.matmul %34, %36, %cst {dimension_numbers = #tpu.dot_dimension_numbers<[1], [0], [0], [1], [0, 0, 1, 1], [], []>} : vector<8x64xbf16>, vector<64x64xbf16>, vector<8x64xf32> -> vector<8x64xf32>
    %38 = vector.extract_strided_slice %37 {offsets = [0, 0], sizes = [8, 32], strides = [1, 1]} : vector<8x64xf32> to vector<8x32xf32>
    %39 = arith.truncf %38 : vector<8x32xf32> to vector<8x32xbf16>
    %40 = vector.extract_strided_slice %37 {offsets = [0, 32], sizes = [8, 32], strides = [1, 1]} : vector<8x64xf32> to vector<8x32xf32>
    %41 = arith.truncf %40 : vector<8x32xf32> to vector<8x32xbf16>
    %cst_28 = arith.constant dense<0.000000e+00> : vector<16x32xf32>
    %42 = tpu.matmul %6, %39, %cst_28 {dimension_numbers = #tpu.dot_dimension_numbers<[1], [0], [0], [1], [0, 0, 1, 1], [], []>} : vector<16x8xbf16>, vector<8x32xbf16>, vector<16x32xf32> -> vector<16x32xf32>
    %cst_29 = arith.constant dense<0.000000e+00> : vector<16x32xf32>
    %43 = tpu.matmul %12, %41, %cst_29 {dimension_numbers = #tpu.dot_dimension_numbers<[1], [0], [0], [1], [0, 0, 1, 1], [], []>} : vector<16x8xbf16>, vector<8x32xbf16>, vector<16x32xf32> -> vector<16x32xf32>
    %44 = arith.addf %42, %43 : vector<16x32xf32>
    %c0_30 = arith.constant 0 : index
    %c0_31 = arith.constant 0 : index
    %c0_32 = arith.constant 0 : index
    %c0_33 = arith.constant 0 : index
    %45 = vector.load %arg8[%c0_30, %c0_31, %c0_32, %c0_33] : memref<2x3x32x32xbf16, #tpu.memory_space<vmem>>, vector<1x1x32x32xbf16>
    %46 = vector.shape_cast %45 : vector<1x1x32x32xbf16> to vector<32x32xbf16>
    %cst_34 = arith.constant dense<0.000000e+00> : vector<16x32xf32>
    %47 = tpu.matmul %20, %46, %cst_34 {dimension_numbers = #tpu.dot_dimension_numbers<[1], [0], [0], [1], [0, 0, 1, 1], [], []>} : vector<16x32xbf16>, vector<32x32xbf16>, vector<16x32xf32> -> vector<16x32xf32>
    %48 = arith.addf %44, %47 : vector<16x32xf32>
    %49 = vector.broadcast %26 : vector<1x32xf32> to vector<16x32xf32>
    %50 = arith.addf %48, %49 : vector<16x32xf32>
    %cst_35 = arith.constant 0.000000e+00 : f32
    %51 = vector.broadcast %cst_35 : f32 to vector<16x32xf32>
    %52 = arith.maximumf %50, %51 : vector<16x32xf32>
    %53 = arith.truncf %52 : vector<16x32xf32> to vector<16x32xbf16>
    %c0_36 = arith.constant 0 : index
    %c1_37 = arith.constant 1 : index
    %c0_38 = arith.constant 0 : index
    %c0_39 = arith.constant 0 : index
    %54 = vector.load %arg8[%c0_36, %c1_37, %c0_38, %c0_39] : memref<2x3x32x32xbf16, #tpu.memory_space<vmem>>, vector<1x1x32x32xbf16>
    %55 = vector.shape_cast %54 : vector<1x1x32x32xbf16> to vector<32x32xbf16>
    %cst_40 = arith.constant dense<0.000000e+00> : vector<16x32xf32>
    %56 = tpu.matmul %53, %55, %cst_40 {dimension_numbers = #tpu.dot_dimension_numbers<[1], [0], [0], [1], [0, 0, 1, 1], [], []>} : vector<16x32xbf16>, vector<32x32xbf16>, vector<16x32xf32> -> vector<16x32xf32>
    %57 = vector.broadcast %28 : vector<1x32xf32> to vector<16x32xf32>
    %58 = arith.addf %56, %57 : vector<16x32xf32>
    %59 = arith.truncf %58 : vector<16x32xf32> to vector<16x32xbf16>
    %cst_41 = arith.constant dense<0.000000e+00> : vector<8x32xf32>
    %60 = tpu.matmul %19, %59, %cst_41 {dimension_numbers = #tpu.dot_dimension_numbers<[1], [0], [0], [1], [0, 0, 1, 1], [], []>} : vector<8x16xbf16>, vector<16x32xbf16>, vector<8x32xf32> -> vector<8x32xf32>
    %61 = arith.truncf %60 : vector<8x32xf32> to vector<8x32xbf16>
    %62 = arith.truncf %22 : vector<8x32xf32> to vector<8x32xbf16>
    %63 = tpu.concatenate %61, %62 in 1 : vector<8x32xbf16>, vector<8x32xbf16> -> vector<8x64xbf16>
    %c0_42 = arith.constant 0 : index
    %c0_43 = arith.constant 0 : index
    %c0_44 = arith.constant 0 : index
    %64 = vector.load %arg7[%c0_42, %c0_43, %c0_44] : memref<2x64x32xbf16, #tpu.memory_space<vmem>>, vector<1x64x32xbf16>
    %65 = vector.shape_cast %64 : vector<1x64x32xbf16> to vector<64x32xbf16>
    %cst_45 = arith.constant dense<0.000000e+00> : vector<8x32xf32>
    %66 = tpu.matmul %63, %65, %cst_45 {dimension_numbers = #tpu.dot_dimension_numbers<[1], [0], [0], [1], [0, 0, 1, 1], [], []>} : vector<8x64xbf16>, vector<64x32xbf16>, vector<8x32xf32> -> vector<8x32xf32>
    %67 = vector.broadcast %30 : vector<1x32xf32> to vector<8x32xf32>
    %68 = arith.addf %66, %67 : vector<8x32xf32>
    %cst_46 = arith.constant 0.000000e+00 : f32
    %69 = vector.broadcast %cst_46 : f32 to vector<8x32xf32>
    %70 = arith.maximumf %68, %69 : vector<8x32xf32>
    %71 = arith.truncf %70 : vector<8x32xf32> to vector<8x32xbf16>
    %c0_47 = arith.constant 0 : index
    %c2_48 = arith.constant 2 : index
    %c0_49 = arith.constant 0 : index
    %c0_50 = arith.constant 0 : index
    %72 = vector.load %arg8[%c0_47, %c2_48, %c0_49, %c0_50] : memref<2x3x32x32xbf16, #tpu.memory_space<vmem>>, vector<1x1x32x32xbf16>
    %73 = vector.shape_cast %72 : vector<1x1x32x32xbf16> to vector<32x32xbf16>
    %cst_51 = arith.constant dense<0.000000e+00> : vector<8x32xf32>
    %74 = tpu.matmul %71, %73, %cst_51 {dimension_numbers = #tpu.dot_dimension_numbers<[1], [0], [0], [1], [0, 0, 1, 1], [], []>} : vector<8x32xbf16>, vector<32x32xbf16>, vector<8x32xf32> -> vector<8x32xf32>
    %75 = vector.broadcast %32 : vector<1x32xf32> to vector<8x32xf32>
    %76 = arith.addf %74, %75 : vector<8x32xf32>
    %c1_52 = arith.constant 1 : index
    %c0_53 = arith.constant 0 : index
    %c0_54 = arith.constant 0 : index
    %77 = vector.load %arg5[%c1_52, %c0_53, %c0_54] : memref<2x8x32xbf16, #tpu.memory_space<vmem>>, vector<1x8x32xbf16>
    %78 = vector.shape_cast %77 : vector<1x8x32xbf16> to vector<8x32xbf16>
    %c1_55 = arith.constant 1 : index
    %c0_56 = arith.constant 0 : index
    %c0_57 = arith.constant 0 : index
    %c0_58 = arith.constant 0 : index
    %79 = vector.load %arg9[%c1_55, %c0_56, %c0_57, %c0_58] : memref<2x4x1x32xf32, #tpu.memory_space<vmem>>, vector<1x1x1x32xf32>
    %80 = vector.shape_cast %79 : vector<1x1x1x32xf32> to vector<1x32xf32>
    %c1_59 = arith.constant 1 : index
    %c1_60 = arith.constant 1 : index
    %c0_61 = arith.constant 0 : index
    %c0_62 = arith.constant 0 : index
    %81 = vector.load %arg9[%c1_59, %c1_60, %c0_61, %c0_62] : memref<2x4x1x32xf32, #tpu.memory_space<vmem>>, vector<1x1x1x32xf32>
    %82 = vector.shape_cast %81 : vector<1x1x1x32xf32> to vector<1x32xf32>
    %c1_63 = arith.constant 1 : index
    %c2_64 = arith.constant 2 : index
    %c0_65 = arith.constant 0 : index
    %c0_66 = arith.constant 0 : index
    %83 = vector.load %arg9[%c1_63, %c2_64, %c0_65, %c0_66] : memref<2x4x1x32xf32, #tpu.memory_space<vmem>>, vector<1x1x1x32xf32>
    %84 = vector.shape_cast %83 : vector<1x1x1x32xf32> to vector<1x32xf32>
    %c1_67 = arith.constant 1 : index
    %c3_68 = arith.constant 3 : index
    %c0_69 = arith.constant 0 : index
    %c0_70 = arith.constant 0 : index
    %85 = vector.load %arg9[%c1_67, %c3_68, %c0_69, %c0_70] : memref<2x4x1x32xf32, #tpu.memory_space<vmem>>, vector<1x1x1x32xf32>
    %86 = vector.shape_cast %85 : vector<1x1x1x32xf32> to vector<1x32xf32>
    %87 = arith.truncf %76 : vector<8x32xf32> to vector<8x32xbf16>
    %88 = tpu.concatenate %87, %78 in 1 : vector<8x32xbf16>, vector<8x32xbf16> -> vector<8x64xbf16>
    %c1_71 = arith.constant 1 : index
    %c0_72 = arith.constant 0 : index
    %c0_73 = arith.constant 0 : index
    %89 = vector.load %arg6[%c1_71, %c0_72, %c0_73] : memref<2x64x64xbf16, #tpu.memory_space<vmem>>, vector<1x64x64xbf16>
    %90 = vector.shape_cast %89 : vector<1x64x64xbf16> to vector<64x64xbf16>
    %cst_74 = arith.constant dense<0.000000e+00> : vector<8x64xf32>
    %91 = tpu.matmul %88, %90, %cst_74 {dimension_numbers = #tpu.dot_dimension_numbers<[1], [0], [0], [1], [0, 0, 1, 1], [], []>} : vector<8x64xbf16>, vector<64x64xbf16>, vector<8x64xf32> -> vector<8x64xf32>
    %92 = vector.extract_strided_slice %91 {offsets = [0, 0], sizes = [8, 32], strides = [1, 1]} : vector<8x64xf32> to vector<8x32xf32>
    %93 = arith.truncf %92 : vector<8x32xf32> to vector<8x32xbf16>
    %94 = vector.extract_strided_slice %91 {offsets = [0, 32], sizes = [8, 32], strides = [1, 1]} : vector<8x64xf32> to vector<8x32xf32>
    %95 = arith.truncf %94 : vector<8x32xf32> to vector<8x32xbf16>
    %cst_75 = arith.constant dense<0.000000e+00> : vector<16x32xf32>
    %96 = tpu.matmul %6, %93, %cst_75 {dimension_numbers = #tpu.dot_dimension_numbers<[1], [0], [0], [1], [0, 0, 1, 1], [], []>} : vector<16x8xbf16>, vector<8x32xbf16>, vector<16x32xf32> -> vector<16x32xf32>
    %cst_76 = arith.constant dense<0.000000e+00> : vector<16x32xf32>
    %97 = tpu.matmul %12, %95, %cst_76 {dimension_numbers = #tpu.dot_dimension_numbers<[1], [0], [0], [1], [0, 0, 1, 1], [], []>} : vector<16x8xbf16>, vector<8x32xbf16>, vector<16x32xf32> -> vector<16x32xf32>
    %98 = arith.addf %96, %97 : vector<16x32xf32>
    %c1_77 = arith.constant 1 : index
    %c0_78 = arith.constant 0 : index
    %c0_79 = arith.constant 0 : index
    %c0_80 = arith.constant 0 : index
    %99 = vector.load %arg8[%c1_77, %c0_78, %c0_79, %c0_80] : memref<2x3x32x32xbf16, #tpu.memory_space<vmem>>, vector<1x1x32x32xbf16>
    %100 = vector.shape_cast %99 : vector<1x1x32x32xbf16> to vector<32x32xbf16>
    %cst_81 = arith.constant dense<0.000000e+00> : vector<16x32xf32>
    %101 = tpu.matmul %20, %100, %cst_81 {dimension_numbers = #tpu.dot_dimension_numbers<[1], [0], [0], [1], [0, 0, 1, 1], [], []>} : vector<16x32xbf16>, vector<32x32xbf16>, vector<16x32xf32> -> vector<16x32xf32>
    %102 = arith.addf %98, %101 : vector<16x32xf32>
    %103 = vector.broadcast %80 : vector<1x32xf32> to vector<16x32xf32>
    %104 = arith.addf %102, %103 : vector<16x32xf32>
    %cst_82 = arith.constant 0.000000e+00 : f32
    %105 = vector.broadcast %cst_82 : f32 to vector<16x32xf32>
    %106 = arith.maximumf %104, %105 : vector<16x32xf32>
    %107 = arith.truncf %106 : vector<16x32xf32> to vector<16x32xbf16>
    %c1_83 = arith.constant 1 : index
    %c1_84 = arith.constant 1 : index
    %c0_85 = arith.constant 0 : index
    %c0_86 = arith.constant 0 : index
    %108 = vector.load %arg8[%c1_83, %c1_84, %c0_85, %c0_86] : memref<2x3x32x32xbf16, #tpu.memory_space<vmem>>, vector<1x1x32x32xbf16>
    %109 = vector.shape_cast %108 : vector<1x1x32x32xbf16> to vector<32x32xbf16>
    %cst_87 = arith.constant dense<0.000000e+00> : vector<16x32xf32>
    %110 = tpu.matmul %107, %109, %cst_87 {dimension_numbers = #tpu.dot_dimension_numbers<[1], [0], [0], [1], [0, 0, 1, 1], [], []>} : vector<16x32xbf16>, vector<32x32xbf16>, vector<16x32xf32> -> vector<16x32xf32>
    %111 = vector.broadcast %82 : vector<1x32xf32> to vector<16x32xf32>
    %112 = arith.addf %110, %111 : vector<16x32xf32>
    %113 = arith.truncf %112 : vector<16x32xf32> to vector<16x32xbf16>
    %cst_88 = arith.constant dense<0.000000e+00> : vector<8x32xf32>
    %114 = tpu.matmul %19, %113, %cst_88 {dimension_numbers = #tpu.dot_dimension_numbers<[1], [0], [0], [1], [0, 0, 1, 1], [], []>} : vector<8x16xbf16>, vector<16x32xbf16>, vector<8x32xf32> -> vector<8x32xf32>
    %115 = arith.truncf %114 : vector<8x32xf32> to vector<8x32xbf16>
    %116 = arith.truncf %76 : vector<8x32xf32> to vector<8x32xbf16>
    %117 = tpu.concatenate %115, %116 in 1 : vector<8x32xbf16>, vector<8x32xbf16> -> vector<8x64xbf16>
    %c1_89 = arith.constant 1 : index
    %c0_90 = arith.constant 0 : index
    %c0_91 = arith.constant 0 : index
    %118 = vector.load %arg7[%c1_89, %c0_90, %c0_91] : memref<2x64x32xbf16, #tpu.memory_space<vmem>>, vector<1x64x32xbf16>
    %119 = vector.shape_cast %118 : vector<1x64x32xbf16> to vector<64x32xbf16>
    %cst_92 = arith.constant dense<0.000000e+00> : vector<8x32xf32>
    %120 = tpu.matmul %117, %119, %cst_92 {dimension_numbers = #tpu.dot_dimension_numbers<[1], [0], [0], [1], [0, 0, 1, 1], [], []>} : vector<8x64xbf16>, vector<64x32xbf16>, vector<8x32xf32> -> vector<8x32xf32>
    %121 = vector.broadcast %84 : vector<1x32xf32> to vector<8x32xf32>
    %122 = arith.addf %120, %121 : vector<8x32xf32>
    %cst_93 = arith.constant 0.000000e+00 : f32
    %123 = vector.broadcast %cst_93 : f32 to vector<8x32xf32>
    %124 = arith.maximumf %122, %123 : vector<8x32xf32>
    %125 = arith.truncf %124 : vector<8x32xf32> to vector<8x32xbf16>
    %c1_94 = arith.constant 1 : index
    %c2_95 = arith.constant 2 : index
    %c0_96 = arith.constant 0 : index
    %c0_97 = arith.constant 0 : index
    %126 = vector.load %arg8[%c1_94, %c2_95, %c0_96, %c0_97] : memref<2x3x32x32xbf16, #tpu.memory_space<vmem>>, vector<1x1x32x32xbf16>
    %127 = vector.shape_cast %126 : vector<1x1x32x32xbf16> to vector<32x32xbf16>
    %cst_98 = arith.constant dense<0.000000e+00> : vector<8x32xf32>
    %128 = tpu.matmul %125, %127, %cst_98 {dimension_numbers = #tpu.dot_dimension_numbers<[1], [0], [0], [1], [0, 0, 1, 1], [], []>} : vector<8x32xbf16>, vector<32x32xbf16>, vector<8x32xf32> -> vector<8x32xf32>
    %129 = vector.broadcast %86 : vector<1x32xf32> to vector<8x32xf32>
    %130 = arith.addf %128, %129 : vector<8x32xf32>
    %131 = arith.truncf %130 : vector<8x32xf32> to vector<8x32xbf16>
    %c0_99 = arith.constant 0 : index
    %c0_100 = arith.constant 0 : index
    %132 = vector.load %arg10[%c0_99, %c0_100] : memref<32x64xbf16, #tpu.memory_space<vmem>>, vector<32x64xbf16>
    %cst_101 = arith.constant dense<0.000000e+00> : vector<8x64xf32>
    %133 = tpu.matmul %131, %132, %cst_101 {dimension_numbers = #tpu.dot_dimension_numbers<[1], [0], [0], [1], [0, 0, 1, 1], [], []>} : vector<8x32xbf16>, vector<32x64xbf16>, vector<8x64xf32> -> vector<8x64xf32>
    %c0_102 = arith.constant 0 : index
    %c0_103 = arith.constant 0 : index
    %134 = vector.load %arg11[%c0_102, %c0_103] : memref<1x64xf32, #tpu.memory_space<vmem>>, vector<1x64xf32>
    %135 = vector.broadcast %134 : vector<1x64xf32> to vector<8x64xf32>
    %136 = arith.addf %133, %135 : vector<8x64xf32>
    %cst_104 = arith.constant 0.000000e+00 : f32
    %137 = vector.broadcast %cst_104 : f32 to vector<8x64xf32>
    %138 = arith.maximumf %136, %137 : vector<8x64xf32>
    %139 = arith.truncf %138 : vector<8x64xf32> to vector<8x64xbf16>
    %c0_105 = arith.constant 0 : index
    %c0_106 = arith.constant 0 : index
    %140 = vector.load %arg12[%c0_105, %c0_106] : memref<64x64xbf16, #tpu.memory_space<vmem>>, vector<64x64xbf16>
    %cst_107 = arith.constant dense<0.000000e+00> : vector<8x64xf32>
    %141 = tpu.matmul %139, %140, %cst_107 {dimension_numbers = #tpu.dot_dimension_numbers<[1], [0], [0], [1], [0, 0, 1, 1], [], []>} : vector<8x64xbf16>, vector<64x64xbf16>, vector<8x64xf32> -> vector<8x64xf32>
    %c0_108 = arith.constant 0 : index
    %c0_109 = arith.constant 0 : index
    %142 = vector.load %arg13[%c0_108, %c0_109] : memref<1x64xf32, #tpu.memory_space<vmem>>, vector<1x64xf32>
    %143 = vector.broadcast %142 : vector<1x64xf32> to vector<8x64xf32>
    %144 = arith.addf %141, %143 : vector<8x64xf32>
    %145 = vector.extract_strided_slice %144 {offsets = [0, 0], sizes = [8, 32], strides = [1, 1]} : vector<8x64xf32> to vector<8x32xf32>
    %146 = vector.extract_strided_slice %144 {offsets = [0, 32], sizes = [8, 32], strides = [1, 1]} : vector<8x64xf32> to vector<8x32xf32>
    %cst_110 = arith.constant dense<0.000000e+00> : vector<8xf32>
    %147 = vector.multi_reduction <add>, %130, %cst_110 [1] : vector<8x32xf32> to vector<8xf32>
    %148 = vector.shape_cast %147 : vector<8xf32> to vector<8x1xf32>
    %cst_111 = arith.constant 3.200000e+01 : f32
    %149 = vector.broadcast %cst_111 : f32 to vector<8x1xf32>
    %150 = arith.divf %148, %149 : vector<8x1xf32>
    %151 = vector.broadcast %150 : vector<8x1xf32> to vector<8x32xf32>
    %152 = arith.subf %130, %151 : vector<8x32xf32>
    %153 = vector.broadcast %150 : vector<8x1xf32> to vector<8x32xf32>
    %154 = arith.subf %130, %153 : vector<8x32xf32>
    %155 = arith.mulf %152, %154 : vector<8x32xf32>
    %cst_112 = arith.constant dense<0.000000e+00> : vector<8xf32>
    %156 = vector.multi_reduction <add>, %155, %cst_112 [1] : vector<8x32xf32> to vector<8xf32>
    %157 = vector.shape_cast %156 : vector<8xf32> to vector<8x1xf32>
    %cst_113 = arith.constant 0.0322580636 : f32
    %158 = vector.broadcast %cst_113 : f32 to vector<8x1xf32>
    %159 = arith.mulf %157, %158 : vector<8x1xf32>
    %160 = math.rsqrt %159 : vector<8x1xf32>
    %161 = vector.broadcast %150 : vector<8x1xf32> to vector<8x32xf32>
    %162 = arith.subf %130, %161 : vector<8x32xf32>
    %163 = vector.broadcast %160 : vector<8x1xf32> to vector<8x32xf32>
    %164 = arith.mulf %162, %163 : vector<8x32xf32>
    %165 = arith.mulf %145, %164 : vector<8x32xf32>
    %166 = arith.addf %165, %146 : vector<8x32xf32>
    %c0_114 = arith.constant 0 : index
    %c0_115 = arith.constant 0 : index
    %167 = vector.load %arg14[%c0_114, %c0_115] : memref<8x32xf32, #tpu.memory_space<vmem>>, vector<8x32xf32>
    tpu.vector_store %arg14[%c0_114, %c0_115], %166 {strides = array<i32>} : memref<8x32xf32, #tpu.memory_space<vmem>>, vector<8x32xf32>,
    return
  }
}

</mosaic_0001>

<llo_original>
// kernel: granola_forward.1
$region0: #{granola_forward.1}
  #allocation0 [shape = 'u32[]', space=smem, size = 0x4, offset = 0x4, fixed_abs, tag = 'smem constant byte address 0x4 - core index']
  #allocation1 [shape = 'u32[72,128]{1,0:T(1,128)}', space=vmem, size = 0x9000, scoped, tag = 'internal scratch']
  %s0 = inlined_call_operand.vmem [shape: s32[16,1], index: 0, kind: input, shape index: {}]
  %s1 = inlined_call_operand.vmem [shape: s32[16,1], index: 1, kind: input, shape index: {}]
  %s2 = inlined_call_operand.vmem [shape: s32[1,16], index: 2, kind: input, shape index: {}]
  %s3 = inlined_call_operand.vmem [shape: bf16[8,32], index: 3, kind: input, shape index: {}]
  %s4 = inlined_call_operand.vmem [shape: bf16[16,32], index: 4, kind: input, shape index: {}]
  %s5 = inlined_call_operand.vmem [shape: bf16[2,8,32], index: 5, kind: input, shape index: {}]
  %s6 = inlined_call_operand.hbm [shape: bf16[2,64,64], index: 6, kind: input, shape index: {}]
  %s7 = inlined_call_operand.vmem [shape: bf16[2,64,32], index: 7, kind: input, shape index: {}]
  %s8 = inlined_call_operand.vmem [shape: bf16[2,3,32,32], index: 8, kind: input, shape index: {}]
  %s9 = inlined_call_operand.hbm [shape: f32[2,4,1,32], index: 9, kind: input, shape index: {}]
  %s10 = inlined_call_operand.vmem [shape: bf16[32,64], index: 10, kind: input, shape index: {}]
  %s11 = inlined_call_operand.hbm [shape: f32[1,64], index: 11, kind: input, shape index: {}]
  %s12 = inlined_call_operand.hbm [shape: bf16[64,64], index: 12, kind: input, shape index: {}]
  %s13 = inlined_call_operand.hbm [shape: f32[1,64], index: 13, kind: input, shape index: {}]
  %s14 = inlined_call_operand.hbm [shape: f32[8,32], index: 14, kind: output, shape index: {}]
  %s15 = sld [smem:[#allocation0]]
  $region86: #{granola_forward.1} parent=0
    _
  %s17 = ssub.s32 1, %s15
  %s18 = scalar_select 0, %s17, %s15
  $region1: #{granola_forward.1} parent=0
    #allocation2 [shape = 'u8[32768]{0}', space=vmem, size = 0x8000, scoped, tag = 'input window, operand 6, single buffered']
    #allocation3 [shape = 's32[1]{0}', space=sflag, size = 0x4, scoped, tag = 'scoped memory for granola_forward.1']
    #allocation4 [shape = 's32[1]{0}', space=sflag, size = 0x4, scoped, tag = 'scoped memory for granola_forward.1']
    #allocation5 [shape = 'u8[4096]{0}', space=vmem, size = 0x1000, scoped, tag = 'input window, operand 9, single buffered']
    #allocation6 [shape = 's32[1]{0}', space=sflag, size = 0x4, scoped, tag = 'scoped memory for granola_forward.1']
    #allocation7 [shape = 'u8[512]{0}', space=vmem, size = 0x400, scoped, tag = 'input window, operand 11, single buffered']
    #allocation8 [shape = 'u8[16384]{0}', space=vmem, size = 0x4000, scoped, tag = 'input window, operand 12, single buffered']
    #allocation9 [shape = 's32[1]{0}', space=sflag, size = 0x4, scoped, tag = 'scoped memory for granola_forward.1']
    #allocation10 [shape = 'u8[512]{0}', space=vmem, size = 0x400, scoped, tag = 'input window, operand 13, single buffered']
    #allocation11 [shape = 'u8[4096]{0}', space=vmem, size = 0x1000, scoped, tag = 'output window, operand 0, single buffered']
    %19 = vsyncpa [#allocation3], 0
    %20 = vsyncpa [#allocation6], 0
    %21 = vsyncpa [#allocation9], 0
    %22 = vsyncpa [#allocation4], 0
    // Predicated region
    $region2: #{granola_forward.1} parent=1 // pred_check
      _
    $region3: #{granola_forward.1} parent=1 // pred_check_branch
      %24 = sbr.rel (0) target = $region5
    $region4: #{granola_forward.1} parent=1 // pred_region
      _
    $region5: #{granola_forward.1} parent=1 // pred_fallthru
      _
    // Predicated region
    $region6: #{granola_forward.1} parent=1 // pred_check
      _
    $region7: #{granola_forward.1} parent=1 // pred_check_branch
      %26 = sbr.rel (0) target = $region9
    $region8: #{granola_forward.1} parent=1 // pred_region
      _
    $region9: #{granola_forward.1} parent=1 // pred_fallthru
      _
    // Predicated region
    $region10: #{granola_forward.1} parent=1 // pred_check
      _
    $region11: #{granola_forward.1} parent=1 // pred_check_branch
      %28 = sbr.rel (0) target = $region13
    $region12: #{granola_forward.1} parent=1 // pred_region
      _
    $region13: #{granola_forward.1} parent=1 // pred_fallthru
      _
    // Predicated region
    $region14: #{granola_forward.1} parent=1 // pred_check
      _
    $region15: #{granola_forward.1} parent=1 // pred_check_branch
      %30 = sbr.rel (0) target = $region17
    $region16: #{granola_forward.1} parent=1 // pred_region
      _
    $region17: #{granola_forward.1} parent=1 // pred_fallthru
      _
    // Predicated region
    $region18: #{granola_forward.1} parent=1 // pred_check
      _
    $region19: #{granola_forward.1} parent=1 // pred_check_branch
      %32 = sbr.rel (0) target = $region21
    $region20: #{granola_forward.1} parent=1 // pred_region
      _
    $region21: #{granola_forward.1} parent=1 // pred_fallthru
      _
    // Predicated region
    $region22: #{granola_forward.1} parent=1 // pred_check
      _
    $region23: #{granola_forward.1} parent=1 // pred_check_branch
      %34 = sbr.rel (0) target = $region25
    $region24: #{granola_forward.1} parent=1 // pred_region
      _
    $region25: #{granola_forward.1} parent=1 // pred_fallthru
      _
    // Predicated region
    $region26: #{granola_forward.1} parent=1 // pred_check
      _
    $region27: #{granola_forward.1} parent=1 // pred_check_branch
      %36 = sbr.rel (0) target = $region29
    $region28: #{granola_forward.1} parent=1 // pred_region
      %38 = vsyncadd [#allocation3], 0
      %s39 = sshll.u32 %s6, 4
      %s40 = int_to_ptr.hbm [resolvable:$true] %s39
      %s41 = sshll.u32 [#allocation2], 4
      %s42 = int_to_ptr.vmem [resolvable:$true] %s41
      %47 = dma.hbm_to_vmem [thread:$0]  %s40, 1024, %s42, [#allocation3], 64, 64, 4
    $region29: #{granola_forward.1} parent=1 // pred_fallthru
      _
    // Predicated region
    $region30: #{granola_forward.1} parent=1 // pred_check
      _
    $region31: #{granola_forward.1} parent=1 // pred_check_branch
      %49 = sbr.rel (0) target = $region33
    $region32: #{granola_forward.1} parent=1 // pred_region
      _
    $region33: #{granola_forward.1} parent=1 // pred_fallthru
      _
    // Predicated region
    $region34: #{granola_forward.1} parent=1 // pred_check
      _
    $region35: #{granola_forward.1} parent=1 // pred_check_branch
      %51 = sbr.rel (0) target = $region37
    $region36: #{granola_forward.1} parent=1 // pred_region
      _
    $region37: #{granola_forward.1} parent=1 // pred_fallthru
      _
    // Predicated region
    $region38: #{granola_forward.1} parent=1 // pred_check
      _
    $region39: #{granola_forward.1} parent=1 // pred_check_branch
      %53 = sbr.rel (0) target = $region41
    $region40: #{granola_forward.1} parent=1 // pred_region
      %55 = vsyncadd [#allocation6], 0
      %s56 = sshll.u32 %s9, 4
      %s57 = int_to_ptr.hbm [resolvable:$true] %s56
      %s58 = sshll.u32 [#allocation5], 4
      %s59 = int_to_ptr.vmem [resolvable:$true] %s58
      %64 = dma.hbm_to_vmem [thread:$0]  %s57, 128, %s59, [#allocation6], 16, 16, 1
    $region41: #{granola_forward.1} parent=1 // pred_fallthru
      _
    // Predicated region
    $region42: #{granola_forward.1} parent=1 // pred_check
      _
    $region43: #{granola_forward.1} parent=1 // pred_check_branch
      %66 = sbr.rel (0) target = $region45
    $region44: #{granola_forward.1} parent=1 // pred_region
      _
    $region45: #{granola_forward.1} parent=1 // pred_fallthru
      _
    // Predicated region
    $region46: #{granola_forward.1} parent=1 // pred_check
      _
    $region47: #{granola_forward.1} parent=1 // pred_check_branch
      %68 = sbr.rel (0) target = $region49
    $region48: #{granola_forward.1} parent=1 // pred_region
      %70 = vsyncadd [#allocation6], 0
      %s72 = sshll.u32 %s11, 4
      %s73 = int_to_ptr.hbm [resolvable:$true] %s72
      %s74 = sshll.u32 [#allocation7], 4
      %s75 = int_to_ptr.vmem [resolvable:$true] %s74
      %77 = dma.hbm_to_vmem [thread:$0]  %s73, 16, %s75, [#allocation6]
    $region49: #{granola_forward.1} parent=1 // pred_fallthru
      _
    // Predicated region
    $region50: #{granola_forward.1} parent=1 // pred_check
      _
    $region51: #{granola_forward.1} parent=1 // pred_check_branch
      %79 = sbr.rel (0) target = $region53
    $region52: #{granola_forward.1} parent=1 // pred_region
      %81 = vsyncadd [#allocation9], 0
      %s82 = sshll.u32 %s12, 4
      %s83 = int_to_ptr.hbm [resolvable:$true] %s82
      %s84 = sshll.u32 [#allocation8], 4
      %s85 = int_to_ptr.vmem [resolvable:$true] %s84
      %90 = dma.hbm_to_vmem [thread:$0]  %s83, 512, %s85, [#allocation9], 64, 64, 4
    $region53: #{granola_forward.1} parent=1 // pred_fallthru
      _
    // Predicated region
    $region54: #{granola_forward.1} parent=1 // pred_check
      _
    $region55: #{granola_forward.1} parent=1 // pred_check_branch
      %92 = sbr.rel (0) target = $region57
    $region56: #{granola_forward.1} parent=1 // pred_region
      %94 = vsyncadd [#allocation9], 0
      %s96 = sshll.u32 %s13, 4
      %s97 = int_to_ptr.hbm [resolvable:$true] %s96
      %s98 = sshll.u32 [#allocation10], 4
      %s99 = int_to_ptr.vmem [resolvable:$true] %s98
      %101 = dma.hbm_to_vmem [thread:$0]  %s97, 16, %s99, [#allocation9]
    $region57: #{granola_forward.1} parent=1 // pred_fallthru
      _
    // Predicated region
    $region58: #{granola_forward.1} parent=1 // pred_check
      _
    $region59: #{granola_forward.1} parent=1 // pred_check_branch
      %103 = sbr.rel (0) target = $region61
    $region60: #{granola_forward.1} parent=1 // pred_region
      %105 = dma.done [#allocation3], 1024
    $region61: #{granola_forward.1} parent=1 // pred_fallthru
      _
    // Predicated region
    $region62: #{granola_forward.1} parent=1 // pred_check
      _
    $region63: #{granola_forward.1} parent=1 // pred_check_branch
      %107 = sbr.rel (0) target = $region65
    $region64: #{granola_forward.1} parent=1 // pred_region
      %109 = dma.done [#allocation6], 128
    $region65: #{granola_forward.1} parent=1 // pred_fallthru
      _
    // Predicated region
    $region66: #{granola_forward.1} parent=1 // pred_check
      _
    $region67: #{granola_forward.1} parent=1 // pred_check_branch
      %111 = sbr.rel (0) target = $region69
    $region68: #{granola_forward.1} parent=1 // pred_region
      %113 = dma.done [#allocation6], 16
    $region69: #{granola_forward.1} parent=1 // pred_fallthru
      _
    // Predicated region
    $region70: #{granola_forward.1} parent=1 // pred_check
      _
    $region71: #{granola_forward.1} parent=1 // pred_check_branch
      %115 = sbr.rel (0) target = $region73
    $region72: #{granola_forward.1} parent=1 // pred_region
      %117 = dma.done [#allocation9], 512
    $region73: #{granola_forward.1} parent=1 // pred_fallthru
      _
    // Predicated region
    $region74: #{granola_forward.1} parent=1 // pred_check
      _
    $region75: #{granola_forward.1} parent=1 // pred_check_branch
      %119 = sbr.rel (0) target = $region77
    $region76: #{granola_forward.1} parent=1 // pred_region
      %121 = dma.done [#allocation9], 16
    $region77: #{granola_forward.1} parent=1 // pred_fallthru
      _
    %v123 = vlaneseq
    %v124 = vand.u32 %v123, 127
    %v125 = vld [vmem:[%s0] sm:$0xff]
    %v126 = vld [vmem:[%s0 + $0x8] sm:$0xff]
    %127 = vset.pattern.permute.xlu0 0
    %128 = vperm.xlu0 %127, %v125
    %v129 = vpop.permute.xlu0 %128
    %130 = vset.pattern.permute.xlu0 0
    %131 = vperm.xlu0 %130, %v126
    %v132 = vpop.permute.xlu0 %131
    %vm133 = vcmp.eq.s32.totalorder %v129, %v124
    %vm134 = vcmp.eq.s32.totalorder %v132, %v124
    %v135 = vsel %vm133, 1, 0
    %v136 = vsel %vm134, 1, 0
    %v137 = vcvt.s32.f32 %v135
    %v138 = vcvt.s32.f32 %v136
    %v139 = vpack.c.bf16 %v138, %v137
    %v140 = vld [vmem:[%s1] sm:$0xff]
    %v141 = vld [vmem:[%s1 + $0x8] sm:$0xff]
    %142 = vset.pattern.permute.xlu0 0
    %143 = vperm.xlu0 %142, %v140
    %v144 = vpop.permute.xlu0 %143
    %145 = vset.pattern.permute.xlu0 0
    %146 = vperm.xlu0 %145, %v141
    %v147 = vpop.permute.xlu0 %146
    %vm148 = vcmp.eq.s32.totalorder %v144, %v124
    %vm149 = vcmp.eq.s32.totalorder %v147, %v124
    %v150 = vsel %vm148, 1, 0
    %v151 = vsel %vm149, 1, 0
    %v152 = vcvt.s32.f32 %v150
    %v153 = vcvt.s32.f32 %v151
    %v154 = vpack.c.bf16 %v153, %v152
    %v155 = vlaneseq
    %v156 = vshrl.u32 %v155, 7
    %v157 = vld [vmem:[%s2] sm:$0x1]
    %v158 = vperm.slane %v157, 0
    %vm159 = vcmp.eq.s32.totalorder %v156, %v158
    %v160 = vsel %vm159, 1, 0
    %v161 = vcvt.s32.f32 %v160
    %v162 = vpack.c.bf16 %v161, %v161
    %v163 = vld [vmem:[%s4] sm:$0xf]
    %v164 = vld [vmem:[%s4 + $0x4] sm:$0xf]
    %v165 = vld [vmem:[%s3] sm:$0xf]
    %v166 = vld [vmem:[%s5] sm:$0xf]
    %v167 = vld [vmem:[#allocation5] sm:$0x1]
    %s168 = scalar_lea.vmem [#allocation5], 1
    %v169 = vld [vmem:[%s168] sm:$0x1]
    %s170 = scalar_lea.vmem [#allocation5], 2
    %v171 = vld [vmem:[%s170] sm:$0x1]
    %s172 = scalar_lea.vmem [#allocation5], 3
    %v173 = vld [vmem:[%s172] sm:$0x1]
    %v175 = vunpack.c.l.b16 %v166
    %v176 = vpack.c.b16 %v175, %v175
    %177 = vrot.lane.b32.xlu0 %v176, 32
    %v178 = vpop.permute.xlu0 %177
    %vm179 = vcmask 261120
    %v182 = vsel %vm179, %v165, %v178
    %v183 = vld [vmem:[#allocation2] sm:$0xf]
    %v184 = vld [vmem:[#allocation2 + $0x4] sm:$0xf]
    %v185 = vld [vmem:[#allocation2 + $0x8] sm:$0xf]
    %v186 = vld [vmem:[#allocation2 + $0xc] sm:$0xf]
    %v187 = vld [vmem:[#allocation2 + $0x10] sm:$0xf]
    %v188 = vld [vmem:[#allocation2 + $0x14] sm:$0xf]
    %v189 = vld [vmem:[#allocation2 + $0x18] sm:$0xf]
    %v190 = vld [vmem:[#allocation2 + $0x1c] sm:$0xf]
    %v199 = vunpack.c.l.b16 %v183
    %v200 = vunpack.c.l.b16 %v184
    %v201 = vunpack.c.l.b16 %v185
    %v202 = vunpack.c.l.b16 %v186
    %v203 = vunpack.c.l.b16 %v187
    %v204 = vunpack.c.l.b16 %v188
    %v205 = vunpack.c.l.b16 %v189
    %v206 = vunpack.c.l.b16 %v190
    %v207 = vpack.c.b16 %v200, %v199
    %v208 = vpack.c.b16 %v202, %v201
    %v209 = vpack.c.b16 %v204, %v203
    %v210 = vpack.c.b16 %v206, %v205
    %vm215 = vcmask 523264
    %v216 = vsel %vm215, %v182, 0
    %218 = vmatpush.bf16.msra.mxu0 0
    %219 = vmatpush.bf16.msra.mxu0 0
    %220 = vmatpush.bf16.msra.mxu0 0
    %221 = vmatpush.bf16.msra.mxu0 0
    %222 = vmatpush.bf16.msra.mxu0 %v210
    %223 = vmatpush.bf16.msra.mxu0 %v209
    %224 = vmatpush.bf16.msra.mxu0 %v208
    %225 = vmatpush.bf16.msra.mxu0 %v207
    %226 = vmatmul.bf16.gmra.mxu0 %v216
    %v227 = vpop.f32.mrf.mxu0
    %v228 = vadd.f32 0.0, %v227
    %v229 = vpop.f32.mrf.mxu0
    %230 = vdwg.mxu0
    %v231 = vpack.c.bf16 %v228, %v228
    %233 = vrot.lane.b32.xlu0 %v231, 96
    %v234 = vpop.permute.xlu0 %233
    %vm235 = vcmask 64512
    %v237 = vsel %vm235, %v154, 0
    %vm239 = vcmask 1043456
    %v241 = vsel %vm239, %v234, 0
    %243 = vmatpush.bf16.msra.mxu0 0
    %244 = vmatpush.bf16.msra.mxu0 0
    %245 = vmatpush.bf16.msra.mxu0 0
    %246 = vmatpush.bf16.msra.mxu0 0
    %247 = vmatpush.bf16.msra.mxu0 0
    %248 = vmatpush.bf16.msra.mxu0 0
    %249 = vmatpush.bf16.msra.mxu0 0
    %250 = vmatpush.bf16.msra.mxu0 %v241
    %251 = vmatmul.bf16.gmra.mxu0 %v237
    %v252 = vpop.f32.mrf.mxu0
    %v253 = vadd.f32 0.0, %v252
    %v254 = vpop.f32.mrf.mxu0
    %v255 = vadd.f32 0.0, %v254
    %256 = vdwg.mxu0
    %v258 = vsel %vm235, %v139, 0
    %v261 = vsel %vm239, %v231, 0
    %263 = vmatpush.bf16.msra.mxu0 0
    %264 = vmatpush.bf16.msra.mxu0 0
    %265 = vmatpush.bf16.msra.mxu0 0
    %266 = vmatpush.bf16.msra.mxu0 0
    %267 = vmatpush.bf16.msra.mxu0 0
    %268 = vmatpush.bf16.msra.mxu0 0
    %269 = vmatpush.bf16.msra.mxu0 0
    %270 = vmatpush.bf16.msra.mxu0 %v261
    %271 = vmatmul.bf16.gmra.mxu0 %v258
    %v272 = vpop.f32.mrf.mxu0
    %v273 = vadd.f32 %v253, %v272
    %v274 = vpop.f32.mrf.mxu0
    %v275 = vadd.f32 %v255, %v274
    %276 = vdwg.mxu0
    %v277 = vld [vmem:[%s8] sm:$0xf]
    %v278 = vld [vmem:[%s8 + $0x4] sm:$0xf]
    %v279 = vld [vmem:[%s8 + $0x8] sm:$0xf]
    %v280 = vld [vmem:[%s8 + $0xc] sm:$0xf]
    %v283 = vunpack.c.l.b16 %v163
    %v284 = vunpack.c.l.b16 %v164
    %v285 = vpack.c.b16 %v284, %v283
    %v290 = vunpack.c.l.b16 %v277
    %v291 = vunpack.c.l.b16 %v278
    %v292 = vunpack.c.l.b16 %v279
    %v293 = vunpack.c.l.b16 %v280
    %v294 = vpack.c.b16 %v291, %v290
    %v295 = vpack.c.b16 %v293, %v292
    %v299 = vsel %vm179, %v285, 0
    %301 = vmatpush.bf16.msra.mxu0 0
    %302 = vmatpush.bf16.msra.mxu0 0
    %303 = vmatpush.bf16.msra.mxu0 0
    %304 = vmatpush.bf16.msra.mxu0 0
    %305 = vmatpush.bf16.msra.mxu0 0
    %306 = vmatpush.bf16.msra.mxu0 0
    %307 = vmatpush.bf16.msra.mxu0 %v295
    %308 = vmatpush.bf16.msra.mxu0 %v294
    %309 = vmatmul.bf16.gmra.mxu0 %v299
    %v310 = vpop.f32.mrf.mxu0
    %v311 = vadd.f32 0.0, %v310
    %v312 = vpop.f32.mrf.mxu0
    %v313 = vadd.f32 0.0, %v312
    %314 = vdwg.mxu0
    %v315 = vadd.f32 %v273, %v311
    %v316 = vadd.f32 %v275, %v313
    %v318 = vperm.slane %v167, 0
    %v320 = vadd.f32 %v315, %v318
    %v321 = vadd.f32 %v316, %v318
    %v322 = vmax.f32 %v320, 0.0
    %v323 = vmax.f32 %v321, 0.0
    %v324 = vpack.c.bf16 %v323, %v322
    %s325 = scalar_lea.vmem %s8, 16
    %v326 = vld [vmem:[%s325] sm:$0xf]
    %v327 = vld [vmem:[%s325 + $0x4] sm:$0xf]
    %v328 = vld [vmem:[%s325 + $0x8] sm:$0xf]
    %v329 = vld [vmem:[%s325 + $0xc] sm:$0xf]
    %v331 = vperm.slane %v169, 0
    %v337 = vunpack.c.l.b16 %v326
    %v338 = vunpack.c.l.b16 %v327
    %v339 = vunpack.c.l.b16 %v328
    %v340 = vunpack.c.l.b16 %v329
    %v341 = vpack.c.b16 %v338, %v337
    %v342 = vpack.c.b16 %v340, %v339
    %v346 = vsel %vm179, %v324, 0
    %348 = vmatpush.bf16.msra.mxu0 0
    %349 = vmatpush.bf16.msra.mxu0 0
    %350 = vmatpush.bf16.msra.mxu0 0
    %351 = vmatpush.bf16.msra.mxu0 0
    %352 = vmatpush.bf16.msra.mxu0 0
    %353 = vmatpush.bf16.msra.mxu0 0
    %354 = vmatpush.bf16.msra.mxu0 %v342
    %355 = vmatpush.bf16.msra.mxu0 %v341
    %356 = vmatmul.bf16.gmra.mxu0 %v346
    %v357 = vpop.f32.mrf.mxu0
    %v358 = vadd.f32 %v331, %v357
    %v359 = vpop.f32.mrf.mxu0
    %v360 = vadd.f32 %v331, %v359
    %361 = vdwg.mxu0
    %v362 = vpack.c.bf16 %v360, %v358
    %vm363 = vcmask 130048
    %v365 = vsel %vm363, %v162, 0
    %367 = vmatpush.bf16.msra.mxu0 0
    %368 = vmatpush.bf16.msra.mxu0 0
    %369 = vmatpush.bf16.msra.mxu0 0
    %370 = vmatpush.bf16.msra.mxu0 0
    %371 = vmatpush.bf16.msra.mxu0 0
    %372 = vmatpush.bf16.msra.mxu0 0
    %373 = vmatpush.bf16.msra.mxu0 0
    %374 = vmatpush.bf16.msra.mxu0 %v362
    %375 = vmatmul.bf16.gmra.mxu0 %v365
    %v376 = vpop.f32.mrf.mxu0
    %v377 = vadd.f32 0.0, %v376
    %v378 = vpop.f32.mrf.mxu0
    %379 = vdwg.mxu0
    %v380 = vpack.c.bf16 %v377, %v377
    %v382 = vunpack.c.l.b16 %v165
    %v383 = vpack.c.b16 %v382, %v382
    %384 = vrot.lane.b32.xlu0 %v383, 32
    %v385 = vpop.permute.xlu0 %384
    %v388 = vsel %vm179, %v380, %v385
    %v389 = vld [vmem:[%s7] sm:$0xf]
    %v390 = vld [vmem:[%s7 + $0x4] sm:$0xf]
    %v391 = vld [vmem:[%s7 + $0x8] sm:$0xf]
    %v392 = vld [vmem:[%s7 + $0xc] sm:$0xf]
    %v393 = vld [vmem:[%s7 + $0x10] sm:$0xf]
    %v394 = vld [vmem:[%s7 + $0x14] sm:$0xf]
    %v395 = vld [vmem:[%s7 + $0x18] sm:$0xf]
    %v396 = vld [vmem:[%s7 + $0x1c] sm:$0xf]
    %v398 = vperm.slane %v171, 0
    %v408 = vunpack.c.l.b16 %v389
    %v409 = vunpack.c.l.b16 %v390
    %v410 = vunpack.c.l.b16 %v391
    %v411 = vunpack.c.l.b16 %v392
    %v412 = vunpack.c.l.b16 %v393
    %v413 = vunpack.c.l.b16 %v394
    %v414 = vunpack.c.l.b16 %v395
    %v415 = vunpack.c.l.b16 %v396
    %v416 = vpack.c.b16 %v409, %v408
    %v417 = vpack.c.b16 %v411, %v410
    %v418 = vpack.c.b16 %v413, %v412
    %v419 = vpack.c.b16 %v415, %v414
    %v424 = vsel %vm215, %v388, 0
    %426 = vmatpush.bf16.msra.mxu0 0
    %427 = vmatpush.bf16.msra.mxu0 0
    %428 = vmatpush.bf16.msra.mxu0 0
    %429 = vmatpush.bf16.msra.mxu0 0
    %430 = vmatpush.bf16.msra.mxu0 %v419
    %431 = vmatpush.bf16.msra.mxu0 %v418
    %432 = vmatpush.bf16.msra.mxu0 %v417
    %433 = vmatpush.bf16.msra.mxu0 %v416
    %434 = vmatmul.bf16.gmra.mxu0 %v424
    %v435 = vpop.f32.mrf.mxu0
    %v436 = vadd.f32 %v398, %v435
    %v437 = vpop.f32.mrf.mxu0
    %438 = vdwg.mxu0
    %v439 = vmax.f32 %v436, 0.0
    %v440 = vpack.c.bf16 %v439, %v439
    %s441 = scalar_lea.vmem %s8, 32
    %v442 = vld [vmem:[%s441] sm:$0xf]
    %v443 = vld [vmem:[%s441 + $0x4] sm:$0xf]
    %v444 = vld [vmem:[%s441 + $0x8] sm:$0xf]
    %v445 = vld [vmem:[%s441 + $0xc] sm:$0xf]
    %v447 = vperm.slane %v173, 0
    %v453 = vunpack.c.l.b16 %v442
    %v454 = vunpack.c.l.b16 %v443
    %v455 = vunpack.c.l.b16 %v444
    %v456 = vunpack.c.l.b16 %v445
    %v457 = vpack.c.b16 %v454, %v453
    %v458 = vpack.c.b16 %v456, %v455
    %v462 = vsel %vm179, %v440, 0
    %464 = vmatpush.bf16.msra.mxu0 0
    %465 = vmatpush.bf16.msra.mxu0 0
    %466 = vmatpush.bf16.msra.mxu0 0
    %467 = vmatpush.bf16.msra.mxu0 0
    %468 = vmatpush.bf16.msra.mxu0 0
    %469 = vmatpush.bf16.msra.mxu0 0
    %470 = vmatpush.bf16.msra.mxu0 %v458
    %471 = vmatpush.bf16.msra.mxu0 %v457
    %472 = vmatmul.bf16.gmra.mxu0 %v462
    %v473 = vpop.f32.mrf.mxu0
    %v474 = vadd.f32 %v447, %v473
    %v475 = vpop.f32.mrf.mxu0
    %476 = vdwg.mxu0
    %s477 = scalar_lea.vmem %s5, 4
    %v478 = vld [vmem:[%s477] sm:$0xf]
    %s479 = scalar_lea.vmem [#allocation5], 4
    %v480 = vld [vmem:[%s479] sm:$0x1]
    %s481 = scalar_lea.vmem [#allocation5], 5
    %v482 = vld [vmem:[%s481] sm:$0x1]
    %s483 = scalar_lea.vmem [#allocation5], 6
    %v484 = vld [vmem:[%s483] sm:$0x1]
    %s485 = scalar_lea.vmem [#allocation5], 7
    %v486 = vld [vmem:[%s485] sm:$0x1]
    %v487 = vpack.c.bf16 %v474, %v474
    %v489 = vunpack.c.l.b16 %v478
    %v490 = vpack.c.b16 %v489, %v489
    %491 = vrot.lane.b32.xlu0 %v490, 32
    %v492 = vpop.permute.xlu0 %491
    %v495 = vsel %vm179, %v487, %v492
    %s496 = scalar_lea.vmem [#allocation2], 32
    %v497 = vld [vmem:[%s496] sm:$0xf]
    %v498 = vld [vmem:[%s496 + $0x4] sm:$0xf]
    %v499 = vld [vmem:[%s496 + $0x8] sm:$0xf]
    %v500 = vld [vmem:[%s496 + $0xc] sm:$0xf]
    %v501 = vld [vmem:[%s496 + $0x10] sm:$0xf]
    %v502 = vld [vmem:[%s496 + $0x14] sm:$0xf]
    %v503 = vld [vmem:[%s496 + $0x18] sm:$0xf]
    %v504 = vld [vmem:[%s496 + $0x1c] sm:$0xf]
    %v513 = vunpack.c.l.b16 %v497
    %v514 = vunpack.c.l.b16 %v498
    %v515 = vunpack.c.l.b16 %v499
    %v516 = vunpack.c.l.b16 %v500
    %v517 = vunpack.c.l.b16 %v501
    %v518 = vunpack.c.l.b16 %v502
    %v519 = vunpack.c.l.b16 %v503
    %v520 = vunpack.c.l.b16 %v504
    %v521 = vpack.c.b16 %v514, %v513
    %v522 = vpack.c.b16 %v516, %v515
    %v523 = vpack.c.b16 %v518, %v517
    %v524 = vpack.c.b16 %v520, %v519
    %v529 = vsel %vm215, %v495, 0
    %531 = vmatpush.bf16.msra.mxu0 0
    %532 = vmatpush.bf16.msra.mxu0 0
    %533 = vmatpush.bf16.msra.mxu0 0
    %534 = vmatpush.bf16.msra.mxu0 0
    %535 = vmatpush.bf16.msra.mxu0 %v524
    %536 = vmatpush.bf16.msra.mxu0 %v523
    %537 = vmatpush.bf16.msra.mxu0 %v522
    %538 = vmatpush.bf16.msra.mxu0 %v521
    %539 = vmatmul.bf16.gmra.mxu0 %v529
    %v540 = vpop.f32.mrf.mxu0
    %v541 = vadd.f32 0.0, %v540
    %v542 = vpop.f32.mrf.mxu0
    %543 = vdwg.mxu0
    %v544 = vpack.c.bf16 %v541, %v541
    %546 = vrot.lane.b32.xlu0 %v544, 96
    %v547 = vpop.permute.xlu0 %546
    %v549 = vsel %vm239, %v547, 0
    %551 = vmatpush.bf16.msra.mxu0 0
    %552 = vmatpush.bf16.msra.mxu0 0
    %553 = vmatpush.bf16.msra.mxu0 0
    %554 = vmatpush.bf16.msra.mxu0 0
    %555 = vmatpush.bf16.msra.mxu0 0
    %556 = vmatpush.bf16.msra.mxu0 0
    %557 = vmatpush.bf16.msra.mxu0 0
    %558 = vmatpush.bf16.msra.mxu0 %v549
    %559 = vmatmul.bf16.gmra.mxu0 %v237
    %v560 = vpop.f32.mrf.mxu0
    %v561 = vadd.f32 0.0, %v560
    %v562 = vpop.f32.mrf.mxu0
    %v563 = vadd.f32 0.0, %v562
    %564 = vdwg.mxu0
    %v566 = vsel %vm239, %v544, 0
    %568 = vmatpush.bf16.msra.mxu0 0
    %569 = vmatpush.bf16.msra.mxu0 0
    %570 = vmatpush.bf16.msra.mxu0 0
    %571 = vmatpush.bf16.msra.mxu0 0
    %572 = vmatpush.bf16.msra.mxu0 0
    %573 = vmatpush.bf16.msra.mxu0 0
    %574 = vmatpush.bf16.msra.mxu0 0
    %575 = vmatpush.bf16.msra.mxu0 %v566
    %576 = vmatmul.bf16.gmra.mxu0 %v258
    %v577 = vpop.f32.mrf.mxu0
    %v578 = vadd.f32 %v561, %v577
    %v579 = vpop.f32.mrf.mxu0
    %v580 = vadd.f32 %v563, %v579
    %581 = vdwg.mxu0
    %s582 = scalar_lea.vmem %s8, 48
    %v583 = vld [vmem:[%s582] sm:$0xf]
    %v584 = vld [vmem:[%s582 + $0x4] sm:$0xf]
    %v585 = vld [vmem:[%s582 + $0x8] sm:$0xf]
    %v586 = vld [vmem:[%s582 + $0xc] sm:$0xf]
    %v591 = vunpack.c.l.b16 %v583
    %v592 = vunpack.c.l.b16 %v584
    %v593 = vunpack.c.l.b16 %v585
    %v594 = vunpack.c.l.b16 %v586
    %v595 = vpack.c.b16 %v592, %v591
    %v596 = vpack.c.b16 %v594, %v593
    %599 = vmatpush.bf16.msra.mxu0 0
    %600 = vmatpush.bf16.msra.mxu0 0
    %601 = vmatpush.bf16.msra.mxu0 0
    %602 = vmatpush.bf16.msra.mxu0 0
    %603 = vmatpush.bf16.msra.mxu0 0
    %604 = vmatpush.bf16.msra.mxu0 0
    %605 = vmatpush.bf16.msra.mxu0 %v596
    %606 = vmatpush.bf16.msra.mxu0 %v595
    %607 = vmatmul.bf16.gmra.mxu0 %v299
    %v608 = vpop.f32.mrf.mxu0
    %v609 = vadd.f32 0.0, %v608
    %v610 = vpop.f32.mrf.mxu0
    %v611 = vadd.f32 0.0, %v610
    %612 = vdwg.mxu0
    %v613 = vadd.f32 %v578, %v609
    %v614 = vadd.f32 %v580, %v611
    %v616 = vperm.slane %v480, 0
    %v618 = vadd.f32 %v613, %v616
    %v619 = vadd.f32 %v614, %v616
    %v620 = vmax.f32 %v618, 0.0
    %v621 = vmax.f32 %v619, 0.0
    %v622 = vpack.c.bf16 %v621, %v620
    %s623 = scalar_lea.vmem %s8, 64
    %v624 = vld [vmem:[%s623] sm:$0xf]
    %v625 = vld [vmem:[%s623 + $0x4] sm:$0xf]
    %v626 = vld [vmem:[%s623 + $0x8] sm:$0xf]
    %v627 = vld [vmem:[%s623 + $0xc] sm:$0xf]
    %v629 = vperm.slane %v482, 0
    %v635 = vunpack.c.l.b16 %v624
    %v636 = vunpack.c.l.b16 %v625
    %v637 = vunpack.c.l.b16 %v626
    %v638 = vunpack.c.l.b16 %v627
    %v639 = vpack.c.b16 %v636, %v635
    %v640 = vpack.c.b16 %v638, %v637
    %v644 = vsel %vm179, %v622, 0
    %646 = vmatpush.bf16.msra.mxu0 0
    %647 = vmatpush.bf16.msra.mxu0 0
    %648 = vmatpush.bf16.msra.mxu0 0
    %649 = vmatpush.bf16.msra.mxu0 0
    %650 = vmatpush.bf16.msra.mxu0 0
    %651 = vmatpush.bf16.msra.mxu0 0
    %652 = vmatpush.bf16.msra.mxu0 %v640
    %653 = vmatpush.bf16.msra.mxu0 %v639
    %654 = vmatmul.bf16.gmra.mxu0 %v644
    %v655 = vpop.f32.mrf.mxu0
    %v656 = vadd.f32 %v629, %v655
    %v657 = vpop.f32.mrf.mxu0
    %v658 = vadd.f32 %v629, %v657
    %659 = vdwg.mxu0
    %v660 = vpack.c.bf16 %v658, %v656
    %661 = vmatpush.bf16.msra.mxu0 0
    %662 = vmatpush.bf16.msra.mxu0 0
    %663 = vmatpush.bf16.msra.mxu0 0
    %664 = vmatpush.bf16.msra.mxu0 0
    %665 = vmatpush.bf16.msra.mxu0 0
    %666 = vmatpush.bf16.msra.mxu0 0
    %667 = vmatpush.bf16.msra.mxu0 0
    %668 = vmatpush.bf16.msra.mxu0 %v660
    %669 = vmatmul.bf16.gmra.mxu0 %v365
    %v670 = vpop.f32.mrf.mxu0
    %v671 = vadd.f32 0.0, %v670
    %v672 = vpop.f32.mrf.mxu0
    %673 = vdwg.mxu0
    %v674 = vpack.c.bf16 %v671, %v671
    %v676 = vunpack.c.l.b16 %v487
    %v677 = vpack.c.b16 %v676, %v676
    %678 = vrot.lane.b32.xlu0 %v677, 32
    %v679 = vpop.permute.xlu0 %678
    %v682 = vsel %vm179, %v674, %v679
    %s683 = scalar_lea.vmem %s7, 32
    %v684 = vld [vmem:[%s683] sm:$0xf]
    %v685 = vld [vmem:[%s683 + $0x4] sm:$0xf]
    %v686 = vld [vmem:[%s683 + $0x8] sm:$0xf]
    %v687 = vld [vmem:[%s683 + $0xc] sm:$0xf]
    %v688 = vld [vmem:[%s683 + $0x10] sm:$0xf]
    %v689 = vld [vmem:[%s683 + $0x14] sm:$0xf]
    %v690 = vld [vmem:[%s683 + $0x18] sm:$0xf]
    %v691 = vld [vmem:[%s683 + $0x1c] sm:$0xf]
    %v693 = vperm.slane %v484, 0
    %v703 = vunpack.c.l.b16 %v684
    %v704 = vunpack.c.l.b16 %v685
    %v705 = vunpack.c.l.b16 %v686
    %v706 = vunpack.c.l.b16 %v687
    %v707 = vunpack.c.l.b16 %v688
    %v708 = vunpack.c.l.b16 %v689
    %v709 = vunpack.c.l.b16 %v690
    %v710 = vunpack.c.l.b16 %v691
    %v711 = vpack.c.b16 %v704, %v703
    %v712 = vpack.c.b16 %v706, %v705
    %v713 = vpack.c.b16 %v708, %v707
    %v714 = vpack.c.b16 %v710, %v709
    %v719 = vsel %vm215, %v682, 0
    %721 = vmatpush.bf16.msra.mxu0 0
    %722 = vmatpush.bf16.msra.mxu0 0
    %723 = vmatpush.bf16.msra.mxu0 0
    %724 = vmatpush.bf16.msra.mxu0 0
    %725 = vmatpush.bf16.msra.mxu0 %v714
    %726 = vmatpush.bf16.msra.mxu0 %v713
    %727 = vmatpush.bf16.msra.mxu0 %v712
    %728 = vmatpush.bf16.msra.mxu0 %v711
    %729 = vmatmul.bf16.gmra.mxu0 %v719
    %v730 = vpop.f32.mrf.mxu0
    %v731 = vadd.f32 %v693, %v730
    %v732 = vpop.f32.mrf.mxu0
    %733 = vdwg.mxu0
    %v734 = vmax.f32 %v731, 0.0
    %v735 = vpack.c.bf16 %v734, %v734
    %s736 = scalar_lea.vmem %s8, 80
    %v737 = vld [vmem:[%s736] sm:$0xf]
    %v738 = vld [vmem:[%s736 + $0x4] sm:$0xf]
    %v739 = vld [vmem:[%s736 + $0x8] sm:$0xf]
    %v740 = vld [vmem:[%s736 + $0xc] sm:$0xf]
    %v742 = vperm.slane %v486, 0
    %v748 = vunpack.c.l.b16 %v737
    %v749 = vunpack.c.l.b16 %v738
    %v750 = vunpack.c.l.b16 %v739
    %v751 = vunpack.c.l.b16 %v740
    %v752 = vpack.c.b16 %v749, %v748
    %v753 = vpack.c.b16 %v751, %v750
    %v757 = vsel %vm179, %v735, 0
    %759 = vmatpush.bf16.msra.mxu0 0
    %760 = vmatpush.bf16.msra.mxu0 0
    %761 = vmatpush.bf16.msra.mxu0 0
    %762 = vmatpush.bf16.msra.mxu0 0
    %763 = vmatpush.bf16.msra.mxu0 0
    %764 = vmatpush.bf16.msra.mxu0 0
    %765 = vmatpush.bf16.msra.mxu0 %v753
    %766 = vmatpush.bf16.msra.mxu0 %v752
    %767 = vmatmul.bf16.gmra.mxu0 %v757
    %v768 = vpop.f32.mrf.mxu0
    %v769 = vadd.f32 %v742, %v768
    %v770 = vpop.f32.mrf.mxu0
    %771 = vdwg.mxu0
    %v772 = vpack.c.bf16 %v769, %v769
    %v773 = vld [vmem:[%s10] sm:$0xf]
    %v774 = vld [vmem:[%s10 + $0x4] sm:$0xf]
    %v775 = vld [vmem:[%s10 + $0x8] sm:$0xf]
    %v776 = vld [vmem:[%s10 + $0xc] sm:$0xf]
    %v777 = vld [vmem:[#allocation7] sm:$0x1]
    %v779 = vperm.slane %v777, 0
    %v785 = vunpack.c.l.b16 %v773
    %v786 = vunpack.c.l.b16 %v774
    %v787 = vunpack.c.l.b16 %v775
    %v788 = vunpack.c.l.b16 %v776
    %v789 = vpack.c.b16 %v786, %v785
    %v790 = vpack.c.b16 %v788, %v787
    %v794 = vsel %vm179, %v772, 0
    %796 = vmatpush.bf16.msra.mxu0 0
    %797 = vmatpush.bf16.msra.mxu0 0
    %798 = vmatpush.bf16.msra.mxu0 0
    %799 = vmatpush.bf16.msra.mxu0 0
    %800 = vmatpush.bf16.msra.mxu0 0
    %801 = vmatpush.bf16.msra.mxu0 0
    %802 = vmatpush.bf16.msra.mxu0 %v790
    %803 = vmatpush.bf16.msra.mxu0 %v789
    %804 = vmatmul.bf16.gmra.mxu0 %v794
    %v805 = vpop.f32.mrf.mxu0
    %v806 = vadd.f32 %v779, %v805
    %v807 = vpop.f32.mrf.mxu0
    %808 = vdwg.mxu0
    %v809 = vmax.f32 %v806, 0.0
    %v810 = vpack.c.bf16 %v809, %v809
    %v811 = vld [vmem:[#allocation8] sm:$0xf]
    %v812 = vld [vmem:[#allocation8 + $0x4] sm:$0xf]
    %v813 = vld [vmem:[#allocation8 + $0x8] sm:$0xf]
    %v814 = vld [vmem:[#allocation8 + $0xc] sm:$0xf]
    %v815 = vld [vmem:[#allocation8 + $0x10] sm:$0xf]
    %v816 = vld [vmem:[#allocation8 + $0x14] sm:$0xf]
    %v817 = vld [vmem:[#allocation8 + $0x18] sm:$0xf]
    %v818 = vld [vmem:[#allocation8 + $0x1c] sm:$0xf]
    %v819 = vld [vmem:[#allocation10] sm:$0x1]
    %v821 = vperm.slane %v819, 0
    %v831 = vunpack.c.l.b16 %v811
    %v832 = vunpack.c.l.b16 %v812
    %v833 = vunpack.c.l.b16 %v813
    %v834 = vunpack.c.l.b16 %v814
    %v835 = vunpack.c.l.b16 %v815
    %v836 = vunpack.c.l.b16 %v816
    %v837 = vunpack.c.l.b16 %v817
    %v838 = vunpack.c.l.b16 %v818
    %v839 = vpack.c.b16 %v832, %v831
    %v840 = vpack.c.b16 %v834, %v833
    %v841 = vpack.c.b16 %v836, %v835
    %v842 = vpack.c.b16 %v838, %v837
    %v848 = vsel %vm215, %v810, 0
    %850 = vmatpush.bf16.msra.mxu0 0
    %851 = vmatpush.bf16.msra.mxu0 0
    %852 = vmatpush.bf16.msra.mxu0 0
    %853 = vmatpush.bf16.msra.mxu0 0
    %854 = vmatpush.bf16.msra.mxu0 %v842
    %855 = vmatpush.bf16.msra.mxu0 %v841
    %856 = vmatpush.bf16.msra.mxu0 %v840
    %857 = vmatpush.bf16.msra.mxu0 %v839
    %858 = vmatmul.bf16.gmra.mxu0 %v848
    %v859 = vpop.f32.mrf.mxu0
    %v860 = vadd.f32 %v821, %v859
    %v861 = vpop.f32.mrf.mxu0
    %862 = vdwg.mxu0
    %v863 = vsel %vm179, %v769, 0.0
    %864 = vadd.xlane.f32.xlu0 %v863
    %v865 = vpop.xlane.xlu0 %864
    %v866 = vrcp.pop 32.0
    %v867 = vmul.f32 32.0, %v866
    %v868 = vsub.f32 1.0, %v867
    %v869 = vmul.f32 %v866, %v868
    %v870 = vadd.f32 %v866, %v869
    %vm871 = vweird.f32 %v866
    %v872 = vsel %vm871, %v866, %v870
    %v873 = vmul.f32 %v865, %v872
    %v874 = vsub.f32 %v769, %v873
    %v875 = vmul.f32 %v874, %v874
    %v876 = vsel %vm179, %v875, 0.0
    %877 = vadd.xlane.f32.xlu0 %v876
    %v878 = vpop.xlane.xlu0 %877
    %v879 = vmul.f32 %v878, 0.032258064
    %v880 = vrsqrt.pop %v879
    %v881 = vmul.f32 %v880, %v879
    %v882 = vmul.f32 %v881, %v880
    %v883 = vmul.f32 0.5, %v882
    %v884 = vsub.f32 1.5, %v883
    %v885 = vmul.f32 %v880, %v884
    %vm886 = vweird.f32 %v879
    %vm887 = vweird.f32 %v880
    %vm888 = vmor %vm886, %vm887
    %v889 = vsel %vm888, %v880, %v885
    %v890 = vmul.f32 %v874, %v889
    %v891 = vmul.f32 %v860, %v890
    %893 = vrot.lane.b32.xlu0 %v860, 96
    %v894 = vpop.permute.xlu0 %893
    %v896 = vadd.f32 %v891, %v894
    %897 = vst.msk [vmem:[#allocation11] sm:$0xff] %vm179, %v896
    // Predicated region
    $region78: #{granola_forward.1} parent=1 // pred_check
      _
    $region79: #{granola_forward.1} parent=1 // pred_check_branch
      %899 = sbr.rel (0) target = $region81
    $region80: #{granola_forward.1} parent=1 // pred_region
      %901 = vsyncadd [#allocation4], 0
      %s903 = sshll.u32 [#allocation11], 4
      %s904 = int_to_ptr.vmem [resolvable:$true] %s903
      %s905 = sshll.u32 %s14, 4
      %s906 = int_to_ptr.hbm [resolvable:$true] %s905
      %908 = dma.vmem_to_hbm [thread:$0]  %s904, 128, %s906, [#allocation4]
    $region81: #{granola_forward.1} parent=1 // pred_fallthru
      _
    // Predicated region
    $region82: #{granola_forward.1} parent=1 // pred_check
      _
    $region83: #{granola_forward.1} parent=1 // pred_check_branch
      %910 = sbr.rel (0) target = $region85
    $region84: #{granola_forward.1} parent=1 // pred_region
      %912 = dma.done [#allocation4], 128
    $region85: #{granola_forward.1} parent=1 // pred_fallthru
      _
    %913 = vsyncpa [#allocation3], 1
    %914 = vsyncpa [#allocation6], 1
    %915 = vsyncpa [#allocation9], 1
    %916 = vsyncpa [#allocation4], 1

</llo_original>
